<compile_context>
chip_gen: v5e
topology: v5e:2x2
jax: 0.10.0
libtpu: 0.0.40
codegen_flags: <defaults>
</compile_context>

<pallas_src>
import functools
import math

import jax
import jax.numpy as jnp
import numpy as np
from jax.experimental import pallas as pl
from jax.experimental.pallas import tpu as pltpu


# Slots in the packed (5, C, C) weight tensor, stored (in, out):  y = x @ W.
_WQ, _WK, _WV, _WOUT, _WFFN = range(5)
# Rows in the packed (4, C) f32 bias tensor (MHA in-proj q/k/v biases + out-proj bias).
_BQ, _BK, _BV, _BOUT = range(4)


def _transformer_layer_kernel(x_ref, w_ref, b_ref, o_ref, *, L, C, H):
    """One batch element per grid step.

    x_ref: (1, L, C)  activations for this batch element
    w_ref: (5, C, C)  packed bf16 weights (grid-invariant, resident in VMEM)
    b_ref: (4, C)     packed f32 biases   (grid-invariant)
    o_ref: (1, L, C)  output
    """
    d = C // H

    x = x_ref[0].astype(jnp.float32)            # (L, C) residual path, f32
    xb = x_ref[0].astype(jnp.bfloat16)          # MXU operand, bf16

    def mm(a_bf16, slot):                       # bf16 x bf16 -> f32 accumulate
        return jnp.dot(a_bf16, w_ref[slot], preferred_element_type=jnp.float32)

    def bias(row):                              # (1, C) f32
        return b_ref[row:row + 1, :]

    # ---- fused (external Linear + MHA in-projection), scale folded into q ----
    qp = mm(xb, _WQ) + bias(_BQ)                # (L, C) f32
    kp = mm(xb, _WK) + bias(_BK)
    vp = mm(xb, _WV) + bias(_BV)

    # ---- batched multi-head attention (no per-head lane slicing / scratch) ---
    def heads(t):                               # (L, C) f32 -> (H, L, d) bf16
        return jnp.transpose(t.reshape(L, H, d), (1, 0, 2)).astype(jnp.bfloat16)

    qh, kh, vh = heads(qp), heads(kp), heads(vp)

    # TODO(synk): for long L, tile this flash-style (q-tile parallel, kv-tile
    # arbitrary) instead of materializing the full (H, L, L) score block; for
    # tiny L, pack several batch elements per grid step to feed the MXU.
    s = jnp.einsum('hld,hmd->hlm', qh, kh,
                   preferred_element_type=jnp.float32)       # (H, L, L) f32
    s = s - jnp.max(s, axis=-1, keepdims=True)
    e = jnp.exp(s)
    p = e * pl.reciprocal(jnp.sum(e, axis=-1, keepdims=True), approx=True)
    ctx = jnp.einsum('hlm,hmd->hld', p.astype(jnp.bfloat16), vh,
                     preferred_element_type=jnp.float32)     # (H, L, d) f32
    attn = jnp.transpose(ctx, (1, 0, 2)).reshape(L, C)       # (L, C) f32

    # ---- MHA out-projection + residual --------------------------------------
    x1 = mm(attn.astype(jnp.bfloat16), _WOUT) + bias(_BOUT) + x

    # ---- folded FFN (fc2 @ fc1, no activation in the reference) + residual ---
    y = mm(x1.astype(jnp.bfloat16), _WFFN) + x1
    o_ref[0] = y.astype(o_ref.dtype)


def transformer_layer(x, weights, biases, num_heads, *, interpret=False):
    """Pallas TransformerLayer forward.  x: (L, B, C) seq-first; returns (L, B, C)."""
    L, B, C = x.shape
    assert C % num_heads == 0, "embed dim must be divisible by num_heads"
    assert weights.shape == (5, C, C) and weights.dtype == jnp.bfloat16
    assert biases.shape == (4, C)

    # Glue: one transpose each way so the grid iterates over batch with a
    # contiguous (L, C) slab per step.
    # TODO(synk): accept (B, L, C) natively (or DMA the strided (L, 1, C) slab
    # manually) to drop these two extra HBM round trips in memory-bound regimes.
    xb = jnp.transpose(x, (1, 0, 2))            # (B, L, C)

    kernel = functools.partial(_transformer_layer_kernel, L=L, C=C, H=num_heads)

    # VMEM budget: resident bf16 weights (+ spare buffer), double-buffered
    # activation blocks, and in-kernel f32 intermediates ((L,C) slabs, (H,L,L) scores).
    itemsize = jnp.dtype(x.dtype).itemsize
    est = (2 * weights.size * 2 + 2 * biases.size * 4
           + 4 * L * C * itemsize
           + 8 * L * C * 4 + 2 * num_heads * L * L * 4)
    vmem_limit = int(min(max(2 * est, 4 << 20), 48 << 20))

    out = pl.pallas_call(
        kernel,
        out_shape=jax.ShapeDtypeStruct((B, L, C), x.dtype),
        grid_spec=pltpu.PrefetchScalarGridSpec(
            num_scalar_prefetch=0,
            grid=(B,),
            in_specs=[
                pl.BlockSpec((1, L, C), lambda b: (b, 0, 0)),
                pl.BlockSpec((5, C, C), lambda b: (0, 0, 0)),   # grid-invariant
                pl.BlockSpec((4, C), lambda b: (0, 0)),         # grid-invariant
            ],
            out_specs=pl.BlockSpec((1, L, C), lambda b: (b, 0, 0)),
        ),
        compiler_params=pltpu.CompilerParams(
            dimension_semantics=("parallel",),
            vmem_limit_bytes=vmem_limit),
        interpret=interpret,
    )(xb, weights, biases)

    return jnp.transpose(out, (1, 0, 2))        # back to (L, B, C)


def pack_params(params, num_heads):
    """Fold torch-convention (out, in) parameters into the kernel's packed form.

    Packing transposes each matrix to (in, out) so the kernel computes y = x @ W,
    folds the bias-free q/k/v Linears into the MHA in-projection, folds fc1@fc2
    (no activation between them), and folds the 1/sqrt(head_dim) scale into the
    q branch.  All folding is done in f32; the result is cast to bf16.
    """
    C = params['q'].shape[0]
    d = C // num_heads
    scale = 1.0 / math.sqrt(d)

    w_in_q, w_in_k, w_in_v = jnp.split(params['in_proj_weight'], 3, axis=0)
    b_in_q, b_in_k, b_in_v = jnp.split(params['in_proj_bias'], 3, axis=0)

    def io(w):                                  # torch (out, in) -> (in, out)
        return w.astype(jnp.float32).T

    wq_eff = io(params['q']) @ io(w_in_q)       # x @ Wq^T @ Winq^T
    wk_eff = io(params['k']) @ io(w_in_k)
    wv_eff = io(params['v']) @ io(w_in_v)
    w_out = io(params['out_proj_weight'])
    w_ffn = io(params['fc1']) @ io(params['fc2'])

    weights = jnp.stack(
        [wq_eff * scale, wk_eff, wv_eff, w_out, w_ffn]).astype(jnp.bfloat16)
    biases = jnp.stack(
        [b_in_q * scale, b_in_k, b_in_v, params['out_proj_bias']]).astype(jnp.float32)
    return weights, biases


def _reference_transformer_layer(x, params, num_heads):
    """Pure-JAX f32 replica of the torch module's forward, for verification."""
    L, B, C = x.shape
    H = num_heads
    d = C // H

    q = x @ params['q'].T
    k = x @ params['k'].T
    v = x @ params['v'].T

    w_in_q, w_in_k, w_in_v = jnp.split(params['in_proj_weight'], 3, axis=0)
    b_in_q, b_in_k, b_in_v = jnp.split(params['in_proj_bias'], 3, axis=0)
    qp = q @ w_in_q.T + b_in_q
    kp = k @ w_in_k.T + b_in_k
    vp = v @ w_in_v.T + b_in_v

    def split_heads(t):                         # (L, B, C) -> (B, H, L, d)
        return jnp.transpose(t.reshape(L, B, H, d), (1, 2, 0, 3))

    qh = split_heads(qp) / math.sqrt(d)
    kh = split_heads(kp)
    vh = split_heads(vp)
    s = jnp.einsum('bhld,bhmd->bhlm', qh, kh)
    p = jax.nn.softmax(s, axis=-1)
    o = jnp.einsum('bhlm,bhmd->bhld', p, vh)
    o = jnp.transpose(o, (2, 0, 1, 3)).reshape(L, B, C)

    attn = o @ params['out_proj_weight'].T + params['out_proj_bias']
    x1 = attn + x
    return (x1 @ params['fc1'].T) @ params['fc2'].T + x1


if __name__ == "__main__":
    L, B, C, H = 8, 2, 32, 4                    # seq, batch, embed, heads

    key = jax.random.PRNGKey(0)
    keys = jax.random.split(key, 10)

    def lin(k):                                 # torch-convention (out, in)
        return jax.random.normal(k, (C, C), jnp.float32) / math.sqrt(C)

    params = {
        'q': lin(keys[0]),
        'k': lin(keys[1]),
        'v': lin(keys[2]),
        'in_proj_weight': jax.random.normal(keys[3], (3 * C, C), jnp.float32) / math.sqrt(C),
        'in_proj_bias': 0.1 * jax.random.normal(keys[4], (3 * C,), jnp.float32),
        'out_proj_weight': lin(keys[5]),
        'out_proj_bias': 0.1 * jax.random.normal(keys[6], (C,), jnp.float32),
        'fc1': lin(keys[7]),
        'fc2': lin(keys[8]),
    }
    x = jax.random.normal(keys[9], (L, B, C), jnp.float32)

    weights, biases = pack_params(params, H)
    out = jax.block_until_ready(transformer_layer(x, weights, biases, H))
    ref = _reference_transformer_layer(x, params, H)

    assert out.shape == (L, B, C), out.shape
    # bf16 MXU operands vs. the f32 reference -> bf16-level tolerance.
    np.testing.assert_allclose(np.asarray(out), np.asarray(ref), rtol=1e-1, atol=1e-1)
    print("KERNEL_OK")
</pallas_src>

<mosaic_0001>
module attributes {stable_mosaic.version = 11 : i64} {
  func.func @_transformer_layer_kernel(%arg0: i32, %arg1: memref<1x8x32xf32, #tpu.memory_space<vmem>>, %arg2: memref<5x32x32xbf16, #tpu.memory_space<vmem>>, %arg3: memref<4x32xf32, #tpu.memory_space<vmem>>, %arg4: memref<1x8x32xf32, #tpu.memory_space<vmem>>) attributes {dimension_semantics = [#tpu.dimension_semantics<parallel>], iteration_bounds = array<i64: 2>, scalar_prefetch = 0 : i64, scratch_operands = 0 : i64, tpu.core_type = #tpu.core_type<tc>, window_params = [{transform_indices = @transform_0, window_bounds = array<i64: 1, 8, 32>}, {pipeline_mode = #tpu.pipeline_mode<synchronous>, transform_indices = @transform_1, window_bounds = array<i64: 5, 32, 32>}, {pipeline_mode = #tpu.pipeline_mode<synchronous>, transform_indices = @transform_2, window_bounds = array<i64: 4, 32>}, {transform_indices = @transform_3, window_bounds = array<i64: 1, 8, 32>}]} {
    %c0 = arith.constant 0 : index
    %c0_0 = arith.constant 0 : index
    %c0_1 = arith.constant 0 : index
    %0 = vector.load %arg1[%c0, %c0_0, %c0_1] : memref<1x8x32xf32, #tpu.memory_space<vmem>>, vector<1x8x32xf32>
    %1 = vector.shape_cast %0 : vector<1x8x32xf32> to vector<8x32xf32>
    %c0_2 = arith.constant 0 : index
    %c0_3 = arith.constant 0 : index
    %c0_4 = arith.constant 0 : index
    %2 = vector.load %arg1[%c0_2, %c0_3, %c0_4] : memref<1x8x32xf32, #tpu.memory_space<vmem>>, vector<1x8x32xf32>
    %3 = vector.shape_cast %2 : vector<1x8x32xf32> to vector<8x32xf32>
    %4 = arith.truncf %3 : vector<8x32xf32> to vector<8x32xbf16>
    %c0_5 = arith.constant 0 : index
    %c0_6 = arith.constant 0 : index
    %c0_7 = arith.constant 0 : index
    %5 = vector.load %arg2[%c0_5, %c0_6, %c0_7] : memref<5x32x32xbf16, #tpu.memory_space<vmem>>, vector<1x32x32xbf16>
    %6 = vector.shape_cast %5 : vector<1x32x32xbf16> to vector<32x32xbf16>
    %cst = arith.constant dense<0.000000e+00> : vector<8x32xf32>
    %7 = tpu.matmul %4, %6, %cst {dimension_numbers = #tpu.dot_dimension_numbers<[1], [0], [0], [1], [0, 0, 1, 1], [], []>} : vector<8x32xbf16>, vector<32x32xbf16>, vector<8x32xf32> -> vector<8x32xf32>
    %c0_8 = arith.constant 0 : index
    %c0_9 = arith.constant 0 : index
    %8 = vector.load %arg3[%c0_8, %c0_9] : memref<4x32xf32, #tpu.memory_space<vmem>>, vector<1x32xf32>
    %9 = vector.broadcast %8 : vector<1x32xf32> to vector<8x32xf32>
    %10 = arith.addf %7, %9 : vector<8x32xf32>
    %c1 = arith.constant 1 : index
    %c0_10 = arith.constant 0 : index
    %c0_11 = arith.constant 0 : index
    %11 = vector.load %arg2[%c1, %c0_10, %c0_11] : memref<5x32x32xbf16, #tpu.memory_space<vmem>>, vector<1x32x32xbf16>
    %12 = vector.shape_cast %11 : vector<1x32x32xbf16> to vector<32x32xbf16>
    %cst_12 = arith.constant dense<0.000000e+00> : vector<8x32xf32>
    %13 = tpu.matmul %4, %12, %cst_12 {dimension_numbers = #tpu.dot_dimension_numbers<[1], [0], [0], [1], [0, 0, 1, 1], [], []>} : vector<8x32xbf16>, vector<32x32xbf16>, vector<8x32xf32> -> vector<8x32xf32>
    %c1_13 = arith.constant 1 : index
    %c0_14 = arith.constant 0 : index
    %14 = vector.load %arg3[%c1_13, %c0_14] : memref<4x32xf32, #tpu.memory_space<vmem>>, vector<1x32xf32>
    %15 = vector.broadcast %14 : vector<1x32xf32> to vector<8x32xf32>
    %16 = arith.addf %13, %15 : vector<8x32xf32>
    %c2 = arith.constant 2 : index
    %c0_15 = arith.constant 0 : index
    %c0_16 = arith.constant 0 : index
    %17 = vector.load %arg2[%c2, %c0_15, %c0_16] : memref<5x32x32xbf16, #tpu.memory_space<vmem>>, vector<1x32x32xbf16>
    %18 = vector.shape_cast %17 : vector<1x32x32xbf16> to vector<32x32xbf16>
    %cst_17 = arith.constant dense<0.000000e+00> : vector<8x32xf32>
    %19 = tpu.matmul %4, %18, %cst_17 {dimension_numbers = #tpu.dot_dimension_numbers<[1], [0], [0], [1], [0, 0, 1, 1], [], []>} : vector<8x32xbf16>, vector<32x32xbf16>, vector<8x32xf32> -> vector<8x32xf32>
    %c2_18 = arith.constant 2 : index
    %c0_19 = arith.constant 0 : index
    %20 = vector.load %arg3[%c2_18, %c0_19] : memref<4x32xf32, #tpu.memory_space<vmem>>, vector<1x32xf32>
    %21 = vector.broadcast %20 : vector<1x32xf32> to vector<8x32xf32>
    %22 = arith.addf %19, %21 : vector<8x32xf32>
    %23 = vector.shape_cast %10 : vector<8x32xf32> to vector<8x4x8xf32>
    %24 = tpu.transpose %23, [1, 0, 2] : vector<8x4x8xf32> -> vector<4x8x8xf32>
    %25 = arith.truncf %24 : vector<4x8x8xf32> to vector<4x8x8xbf16>
    %26 = vector.shape_cast %16 : vector<8x32xf32> to vector<8x4x8xf32>
    %27 = tpu.transpose %26, [1, 0, 2] : vector<8x4x8xf32> -> vector<4x8x8xf32>
    %28 = arith.truncf %27 : vector<4x8x8xf32> to vector<4x8x8xbf16>
    %29 = vector.shape_cast %22 : vector<8x32xf32> to vector<8x4x8xf32>
    %30 = tpu.transpose %29, [1, 0, 2] : vector<8x4x8xf32> -> vector<4x8x8xf32>
    %31 = arith.truncf %30 : vector<4x8x8xf32> to vector<4x8x8xbf16>
    "tpu.trace_start"() <{level = 10 : i32, message = "hld,hmd->hlm"}> : () -> ()
    %cst_20 = arith.constant dense<0.000000e+00> : vector<4x8x8xf32>
    %32 = tpu.matmul %25, %28, %cst_20 {dimension_numbers = #tpu.dot_dimension_numbers<[2], [2], [1], [1], [0, 0, 0, 1, 1, 1], [0], [0]>} : vector<4x8x8xbf16>, vector<4x8x8xbf16>, vector<4x8x8xf32> -> vector<4x8x8xf32>
    "tpu.trace_stop"() : () -> ()
    %cst_21 = arith.constant dense<0xFF800000> : vector<4x8xf32>
    %33 = vector.multi_reduction <maximumf>, %32, %cst_21 [2] : vector<4x8x8xf32> to vector<4x8xf32>
    %34 = vector.shape_cast %33 : vector<4x8xf32> to vector<4x8x1xf32>
    %35 = vector.broadcast %34 : vector<4x8x1xf32> to vector<4x8x8xf32>
    %36 = arith.subf %32, %35 : vector<4x8x8xf32>
    %37 = math.exp %36 : vector<4x8x8xf32>
    %cst_22 = arith.constant dense<0.000000e+00> : vector<4x8xf32>
    %38 = vector.multi_reduction <add>, %37, %cst_22 [2] : vector<4x8x8xf32> to vector<4x8xf32>
    %39 = vector.shape_cast %38 : vector<4x8xf32> to vector<4x8x1xf32>
    %40 = tpu.reciprocal %39 {approx = true} : vector<4x8x1xf32> -> vector<4x8x1xf32>
    %41 = vector.broadcast %40 : vector<4x8x1xf32> to vector<4x8x8xf32>
    %42 = arith.mulf %37, %41 : vector<4x8x8xf32>
    %43 = arith.truncf %42 : vector<4x8x8xf32> to vector<4x8x8xbf16>
    "tpu.trace_start"() <{level = 10 : i32, message = "hlm,hmd->hld"}> : () -> ()
    %cst_23 = arith.constant dense<0.000000e+00> : vector<4x8x8xf32>
    %44 = tpu.matmul %43, %31, %cst_23 {dimension_numbers = #tpu.dot_dimension_numbers<[2], [1], [1], [2], [0, 0, 0, 1, 1, 2], [0], [0]>} : vector<4x8x8xbf16>, vector<4x8x8xbf16>, vector<4x8x8xf32> -> vector<4x8x8xf32>
    "tpu.trace_stop"() : () -> ()
    %45 = tpu.transpose %44, [1, 0, 2] : vector<4x8x8xf32> -> vector<8x4x8xf32>
    %46 = vector.shape_cast %45 : vector<8x4x8xf32> to vector<8x32xf32>
    %47 = arith.truncf %46 : vector<8x32xf32> to vector<8x32xbf16>
    %c3 = arith.constant 3 : index
    %c0_24 = arith.constant 0 : index
    %c0_25 = arith.constant 0 : index
    %48 = vector.load %arg2[%c3, %c0_24, %c0_25] : memref<5x32x32xbf16, #tpu.memory_space<vmem>>, vector<1x32x32xbf16>
    %49 = vector.shape_cast %48 : vector<1x32x32xbf16> to vector<32x32xbf16>
    %cst_26 = arith.constant dense<0.000000e+00> : vector<8x32xf32>
    %50 = tpu.matmul %47, %49, %cst_26 {dimension_numbers = #tpu.dot_dimension_numbers<[1], [0], [0], [1], [0, 0, 1, 1], [], []>} : vector<8x32xbf16>, vector<32x32xbf16>, vector<8x32xf32> -> vector<8x32xf32>
    %c3_27 = arith.constant 3 : index
    %c0_28 = arith.constant 0 : index
    %51 = vector.load %arg3[%c3_27, %c0_28] : memref<4x32xf32, #tpu.memory_space<vmem>>, vector<1x32xf32>
    %52 = vector.broadcast %51 : vector<1x32xf32> to vector<8x32xf32>
    %53 = arith.addf %50, %52 : vector<8x32xf32>
    %54 = arith.addf %53, %1 : vector<8x32xf32>
    %55 = arith.truncf %54 : vector<8x32xf32> to vector<8x32xbf16>
    %c4 = arith.constant 4 : index
    %c0_29 = arith.constant 0 : index
    %c0_30 = arith.constant 0 : index
    %56 = vector.load %arg2[%c4, %c0_29, %c0_30] : memref<5x32x32xbf16, #tpu.memory_space<vmem>>, vector<1x32x32xbf16>
    %57 = vector.shape_cast %56 : vector<1x32x32xbf16> to vector<32x32xbf16>
    %cst_31 = arith.constant dense<0.000000e+00> : vector<8x32xf32>
    %58 = tpu.matmul %55, %57, %cst_31 {dimension_numbers = #tpu.dot_dimension_numbers<[1], [0], [0], [1], [0, 0, 1, 1], [], []>} : vector<8x32xbf16>, vector<32x32xbf16>, vector<8x32xf32> -> vector<8x32xf32>
    %59 = arith.addf %58, %54 : vector<8x32xf32>
    %c0_32 = arith.constant 0 : index
    %c0_33 = arith.constant 0 : index
    %c0_34 = arith.constant 0 : index
    %60 = vector.load %arg4[%c0_32, %c0_33, %c0_34] : memref<1x8x32xf32, #tpu.memory_space<vmem>>, vector<1x8x32xf32>
    %61 = vector.shape_cast %60 : vector<1x8x32xf32> to vector<8x32xf32>
    %62 = vector.shape_cast %59 : vector<8x32xf32> to vector<1x8x32xf32>
    tpu.vector_store %arg4[%c0_32, %c0_33, %c0_34], %62 {strides = array<i32>} : memref<1x8x32xf32, #tpu.memory_space<vmem>>, vector<1x8x32xf32>,
    return
  }
  func.func @transform_0(%arg0: i32) -> (i32, i32, i32) {
    %c0_i32 = arith.constant 0 : i32
    %c0_i32_0 = arith.constant 0 : i32
    %c0_i32_1 = arith.constant 0 : i32
    return %arg0, %c0_i32, %c0_i32_0 : i32, i32, i32
  }
  func.func @transform_1(%arg0: i32) -> (i32, i32, i32) {
    %c0_i32 = arith.constant 0 : i32
    %c0_i32_0 = arith.constant 0 : i32
    %c0_i32_1 = arith.constant 0 : i32
    %c0_i32_2 = arith.constant 0 : i32
    return %c0_i32, %c0_i32_0, %c0_i32_1 : i32, i32, i32
  }
  func.func @transform_2(%arg0: i32) -> (i32, i32) {
    %c0_i32 = arith.constant 0 : i32
    %c0_i32_0 = arith.constant 0 : i32
    %c0_i32_1 = arith.constant 0 : i32
    return %c0_i32, %c0_i32_0 : i32, i32
  }
  func.func @transform_3(%arg0: i32) -> (i32, i32, i32) {
    %c0_i32 = arith.constant 0 : i32
    %c0_i32_0 = arith.constant 0 : i32
    %c0_i32_1 = arith.constant 0 : i32
    return %arg0, %c0_i32, %c0_i32_0 : i32, i32, i32
  }
}

</mosaic_0001>

<llo_original>
// kernel: tpu_custom_call.1
$region0: #{tpu_custom_call.1}
  #allocation0 [shape = 'u32[]', space=smem, size = 0x4, offset = 0x4, fixed_abs, tag = 'smem constant byte address 0x4 - core index']
  #allocation1 [shape = 'u32[72,128]{1,0:T(1,128)}', space=vmem, size = 0x9000, scoped, tag = 'internal scratch']
  %s0 = inlined_call_operand.hbm [shape: f32[2,8,32], index: 0, kind: input, shape index: {}]
  %s1 = inlined_call_operand.hbm [shape: bf16[5,32,32], index: 1, kind: input, shape index: {}]
  %s2 = inlined_call_operand.hbm [shape: f32[4,32], index: 2, kind: input, shape index: {}]
  %s3 = inlined_call_operand.hbm [shape: f32[2,8,32], index: 3, kind: output, shape index: {}]
  %s4 = sld [smem:[#allocation0]]
  $region57: #{tpu_custom_call.1} parent=0
    _
  %s6 = ssub.s32 1, %s4
  %s7 = scalar_select 0, %s6, %s4
  $region1: #{tpu_custom_call.1} parent=0
    #allocation2 [shape = 'u8[8192]{0}', space=vmem, size = 0x2000, scoped, tag = 'input window, operand 0']
    #allocation3 [shape = 's32[2]{0}', space=sflag, size = 0x8, scoped, tag = 'scoped memory for tpu_custom_call.1']
    #allocation4 [shape = 's32[2]{0}', space=sflag, size = 0x8, scoped, tag = 'scoped memory for tpu_custom_call.1']
    #allocation5 [shape = 'u8[40960]{0}', space=vmem, size = 0xa000, scoped, tag = 'input window, operand 1, single buffered']
    #allocation6 [shape = 's32[1]{0}', space=sflag, size = 0x4, scoped, tag = 'scoped memory for tpu_custom_call.1']
    #allocation7 [shape = 'u8[2048]{0}', space=vmem, size = 0x800, scoped, tag = 'input window, operand 2, single buffered']
    #allocation8 [shape = 'u8[8192]{0}', space=vmem, size = 0x2000, scoped, tag = 'output window, operand 0']
    %8 = vsyncpa [#allocation3], 0
    %s9 = scalar_lea.sflag [#allocation3], 1
    %10 = vsyncpa %s9, 0
    %11 = vsyncpa [#allocation6], 0
    %12 = vsyncpa [#allocation4], 0
    %s13 = scalar_lea.sflag [#allocation4], 1
    %14 = vsyncpa %s13, 0
    loop: start=0, step=1, limit=4
    $region2: #{tpu_custom_call.1} parent=1 // loop_pre_header
      _
    $region3: #{tpu_custom_call.1} parent=1 // loop_header
      %s16 = sphi 0, %s20
      %p17 = scmp.ge.s32.totalorder %s16, 4
      %s26 = sphi 0, %s28
      %s29 = sphi 0, %s26
      %s30 = sphi 0, %s29
      %s46 = sphi 0, %s30
      %s50 = sphi 0, %s50
      %s52 = sphi 0, %s50
      %s53 = sphi 0, %s52
      %s67 = sphi 0, %s53
      %s71 = sphi 0, %s71
      %s73 = sphi 0, %s71
      %s74 = sphi 0, %s73
      %s88 = sphi 0, %s74
      %s94 = sphi 0, %s96
      %s97 = sphi 0, %s94
      %s98 = sphi 0, %s97
      %s114 = sphi 0, %s98
    $region4: #{tpu_custom_call.1} parent=1 // loop_header_branch
      %19 = sbr.rel (%p17) target = $region8
    $region5: #{tpu_custom_call.1} parent=1 // loop_body
      %s21 = ssub.s32 %s16, 1
      %s22 = ssub.s32 %s16, 2
      %s23 = sadd.s32 %s16, 1
      %s24 = ssub.s32 %s16, %s23
      %p25 = scmp.eq.s32.totalorder %s24, 0
      %s27 = sadd.s32 %s26, 1
      %s28 = scalar_select %p25, %s26, %s27
      %p31 = pneg %p25
      %p32 = scmp.eq.s32.totalorder %s16, 1
      %p33 = por %p31, %p32
      %p34 = scmp.ne.s32.totalorder %s26, %s29
      %p35 = scmp.eq.s32.totalorder %s16, 0
      %p36 = por %p34, %p35
      %p37 = scmp.ne.s32.totalorder %s26, %s29
      %p38 = scmp.eq.s32.totalorder %s21, 1
      %p39 = por %p37, %p38
      %p40 = scmp.ne.s32.totalorder %s29, %s30
      %p41 = scmp.eq.s32.totalorder %s21, 0
      %p42 = por %p40, %p41
      %p43 = scmp.ne.s32.totalorder %s29, %s30
      %p44 = scmp.eq.s32.totalorder %s22, 1
      %p45 = por %p43, %p44
      %p47 = scmp.ne.s32.totalorder %s30, %s46
      %p48 = scmp.eq.s32.totalorder %s22, 0
      %p49 = por %p47, %p48
      %s51 = sadd.s32 %s50, 1
      %p54 = scmp.eq.s32.totalorder %s16, 1
      %p55 = scmp.ne.s32.totalorder %s50, %s52
      %p56 = scmp.eq.s32.totalorder %s16, 0
      %p57 = por %p55, %p56
      %p58 = scmp.ne.s32.totalorder %s50, %s52
      %p59 = scmp.eq.s32.totalorder %s21, 1
      %p60 = por %p58, %p59
      %p61 = scmp.ne.s32.totalorder %s52, %s53
      %p62 = scmp.eq.s32.totalorder %s21, 0
      %p63 = por %p61, %p62
      %p64 = scmp.ne.s32.totalorder %s52, %s53
      %p65 = scmp.eq.s32.totalorder %s22, 1
      %p66 = por %p64, %p65
      %p68 = scmp.ne.s32.totalorder %s53, %s67
      %p69 = scmp.eq.s32.totalorder %s22, 0
      %p70 = por %p68, %p69
      %s72 = sadd.s32 %s71, 1
      %p75 = scmp.eq.s32.totalorder %s16, 1
      %p76 = scmp.ne.s32.totalorder %s71, %s73
      %p77 = scmp.eq.s32.totalorder %s16, 0
      %p78 = por %p76, %p77
      %p79 = scmp.ne.s32.totalorder %s71, %s73
      %p80 = scmp.eq.s32.totalorder %s21, 1
      %p81 = por %p79, %p80
      %p82 = scmp.ne.s32.totalorder %s73, %s74
      %p83 = scmp.eq.s32.totalorder %s21, 0
      %p84 = por %p82, %p83
      %p85 = scmp.ne.s32.totalorder %s73, %s74
      %p86 = scmp.eq.s32.totalorder %s22, 1
      %p87 = por %p85, %p86
      %p89 = scmp.ne.s32.totalorder %s74, %s88
      %p90 = scmp.eq.s32.totalorder %s22, 0
      %p91 = por %p89, %p90
      %s92 = ssub.s32 %s16, %s23
      %p93 = scmp.eq.s32.totalorder %s92, 0
      %s95 = sadd.s32 %s94, 1
      %s96 = scalar_select %p93, %s94, %s95
      %p99 = pneg %p93
      %p100 = scmp.eq.s32.totalorder %s16, 1
      %p101 = por %p99, %p100
      %p102 = scmp.ne.s32.totalorder %s94, %s97
      %p103 = scmp.eq.s32.totalorder %s16, 0
      %p104 = por %p102, %p103
      %p105 = scmp.ne.s32.totalorder %s94, %s97
      %p106 = scmp.eq.s32.totalorder %s21, 1
      %p107 = por %p105, %p106
      %p108 = scmp.ne.s32.totalorder %s97, %s98
      %p109 = scmp.eq.s32.totalorder %s21, 0
      %p110 = por %p108, %p109
      %p111 = scmp.ne.s32.totalorder %s97, %s98
      %p112 = scmp.eq.s32.totalorder %s22, 1
      %p113 = por %p111, %p112
      %p115 = scmp.ne.s32.totalorder %s98, %s114
      %p116 = scmp.eq.s32.totalorder %s22, 0
      %p117 = por %p115, %p116
      %p118 = scmp.le.s32.totalorder 1, %s16
      %p119 = scmp.lt.s32.totalorder %s16, 3
      %p120 = pnand %p118, %p119
      %p121 = pneg %p120
      // Predicated region
      $region9: #{tpu_custom_call.1} parent=5 // pred_check
        _
      $region10: #{tpu_custom_call.1} parent=5 // pred_check_branch
        %123 = sbr.rel (%p120) target = $region12
      $region11: #{tpu_custom_call.1} parent=5 // pred_region
        %s124 = ssub.s32 %s16, 1
        // Predicated region
        $region13: #{tpu_custom_call.1} parent=11 // pred_check
          %p125 = pneg %p63
        $region14: #{tpu_custom_call.1} parent=11 // pred_check_branch
          %127 = sbr.rel (%p125) target = $region16
        $region15: #{tpu_custom_call.1} parent=11 // pred_region
          %129 = vsyncadd [#allocation6], 0
          %s130 = sshll.u32 %s1, 4
          %s131 = int_to_ptr.hbm [resolvable:$true] %s130
          %s132 = sshll.u32 [#allocation5], 4
          %s133 = int_to_ptr.vmem [resolvable:$true] %s132
          %138 = dma.hbm_to_vmem [thread:$0]  %s131, 1280, %s133, [#allocation6], 64, 64, 4
        $region16: #{tpu_custom_call.1} parent=11 // pred_fallthru
          _
        // Predicated region
        $region17: #{tpu_custom_call.1} parent=11 // pred_check
          %p139 = pneg %p84
        $region18: #{tpu_custom_call.1} parent=11 // pred_check_branch
          %141 = sbr.rel (%p139) target = $region20
        $region19: #{tpu_custom_call.1} parent=11 // pred_region
          %143 = vsyncadd [#allocation6], 0
          %s145 = sshll.u32 %s2, 4
          %s146 = int_to_ptr.hbm [resolvable:$true] %s145
          %s147 = sshll.u32 [#allocation7], 4
          %s148 = int_to_ptr.vmem [resolvable:$true] %s147
          %150 = dma.hbm_to_vmem [thread:$0]  %s146, 64, %s148, [#allocation6]
        $region20: #{tpu_custom_call.1} parent=11 // pred_fallthru
          _
      $region12: #{tpu_custom_call.1} parent=5 // pred_fallthru
        _
      %p151 = scmp.lt.s32.totalorder %s16, 2
      // Predicated region
      $region21: #{tpu_custom_call.1} parent=5 // pred_check
        %p152 = pneg %p151
      $region22: #{tpu_custom_call.1} parent=5 // pred_check_branch
        %154 = sbr.rel (%p152) target = $region24
      $region23: #{tpu_custom_call.1} parent=5 // pred_region
        // Predicated region
        $region25: #{tpu_custom_call.1} parent=23 // pred_check
          %p155 = pneg %p36
        $region26: #{tpu_custom_call.1} parent=23 // pred_check_branch
          %157 = sbr.rel (%p155) target = $region28
        $region27: #{tpu_custom_call.1} parent=23 // pred_region
          %s158 = sand.u32 %s26, 1
          %s159 = scalar_lea.sflag [#allocation3], %s158
          %s160 = sand.u32 %s26, 1
          %s161 = smul.addr %s160, 8
          %s162 = scalar_lea.vmem [#allocation2], %s161
          %164 = vsyncadd %s159, 0
          %s165 = smul.addr %s16, 8
          %s166 = scalar_lea.hbm %s0, %s165
          %s168 = sshll.u32 %s166, 4
          %s169 = int_to_ptr.hbm [resolvable:$true] %s168
          %s170 = sshll.u32 %s162, 4
          %s171 = int_to_ptr.vmem [resolvable:$true] %s170
          %173 = dma.hbm_to_vmem [thread:$0]  %s169, 128, %s171, %s159
        $region28: #{tpu_custom_call.1} parent=23 // pred_fallthru
          _
      $region24: #{tpu_custom_call.1} parent=5 // pred_fallthru
        _
      %p174 = scmp.le.s32.totalorder 1, %s16
      %p175 = scmp.lt.s32.totalorder %s16, 3
      %p176 = pnand %p174, %p175
      %p177 = pneg %p176
      // Predicated region
      $region29: #{tpu_custom_call.1} parent=5 // pred_check
        _
      $region30: #{tpu_custom_call.1} parent=5 // pred_check_branch
        %179 = sbr.rel (%p176) target = $region32
      $region31: #{tpu_custom_call.1} parent=5 // pred_region
        %s180 = ssub.s32 %s16, 1
        %s181 = sand.u32 %s29, 1
        %s182 = scalar_lea.sflag [#allocation3], %s181
        %s183 = sand.u32 %s29, 1
        %s184 = smul.addr %s183, 8
        %s185 = scalar_lea.vmem [#allocation2], %s184
        // Predicated region
        $region33: #{tpu_custom_call.1} parent=31 // pred_check
          %p186 = pneg %p42
        $region34: #{tpu_custom_call.1} parent=31 // pred_check_branch
          %188 = sbr.rel (%p186) target = $region36
        $region35: #{tpu_custom_call.1} parent=31 // pred_region
          %190 = dma.done %s182, 128
        $region36: #{tpu_custom_call.1} parent=31 // pred_fallthru
          _
        // Predicated region
        $region37: #{tpu_custom_call.1} parent=31 // pred_check
          %p191 = pneg %p63
        $region38: #{tpu_custom_call.1} parent=31 // pred_check_branch
          %193 = sbr.rel (%p191) target = $region40
        $region39: #{tpu_custom_call.1} parent=31 // pred_region
          %195 = dma.done [#allocation6], 1280
        $region40: #{tpu_custom_call.1} parent=31 // pred_fallthru
          _
        // Predicated region
        $region41: #{tpu_custom_call.1} parent=31 // pred_check
          %p196 = pneg %p84
        $region42: #{tpu_custom_call.1} parent=31 // pred_check_branch
          %198 = sbr.rel (%p196) target = $region44
        $region43: #{tpu_custom_call.1} parent=31 // pred_region
          %200 = dma.done [#allocation6], 64
        $region44: #{tpu_custom_call.1} parent=31 // pred_fallthru
          _
        %s201 = sand.u32 %s29, 1
        %s202 = scalar_lea.sflag [#allocation3], %s201
        %s203 = sand.u32 %s29, 1
        %s204 = smul.addr %s203, 8
        %s205 = scalar_lea.vmem [#allocation2], %s204
        %p206 = pneg %p42
        %p207 = pneg %p39
        %p208 = pneg %p63
        %p209 = pneg %p60
        %p210 = pneg %p84
        %p211 = pneg %p81
        %p212 = pneg %p110
        %p213 = pneg %p107
        %s214 = sand.u32 %s97, 1
        %s215 = scalar_lea.sflag [#allocation4], %s214
        %s216 = sand.u32 %s97, 1
        %s217 = smul.addr %s216, 8
        %s218 = scalar_lea.vmem [#allocation8], %s217
        %v220 = vld [vmem:[%s185] sm:$0xff]
        %v221 = vpack.c.bf16 %v220, %v220
        %v222 = vld [vmem:[#allocation5] sm:$0xf]
        %v223 = vld [vmem:[#allocation5 + $0x4] sm:$0xf]
        %v224 = vld [vmem:[#allocation5 + $0x8] sm:$0xf]
        %v225 = vld [vmem:[#allocation5 + $0xc] sm:$0xf]
        %v226 = vld [vmem:[#allocation7] sm:$0x1]
        %v227 = vperm.slane %v226, 0
        %v232 = vunpack.c.l.b16 %v222
        %v233 = vunpack.c.l.b16 %v223
        %v234 = vunpack.c.l.b16 %v224
        %v235 = vunpack.c.l.b16 %v225
        %v236 = vpack.c.b16 %v233, %v232
        %v237 = vpack.c.b16 %v235, %v234
        %vm240 = vcmask 261120
        %v242 = vsel %vm240, %v221, 0
        %244 = vmatpush.bf16.msra.mxu0 0
        %245 = vmatpush.bf16.msra.mxu0 0
        %246 = vmatpush.bf16.msra.mxu0 0
        %247 = vmatpush.bf16.msra.mxu0 0
        %248 = vmatpush.bf16.msra.mxu0 0
        %249 = vmatpush.bf16.msra.mxu0 0
        %250 = vmatpush.bf16.msra.mxu0 %v237
        %251 = vmatpush.bf16.msra.mxu0 %v236
        %252 = vmatmul.bf16.gmra.mxu0 %v242
        %v253 = vpop.f32.mrf.mxu0
        %v254 = vadd.f32 %v227, %v253
        %v255 = vpop.f32.mrf.mxu0
        %256 = vdwg.mxu0
        %s257 = scalar_lea.vmem [#allocation5], 16
        %v258 = vld [vmem:[%s257] sm:$0xf]
        %v259 = vld [vmem:[%s257 + $0x4] sm:$0xf]
        %v260 = vld [vmem:[%s257 + $0x8] sm:$0xf]
        %v261 = vld [vmem:[%s257 + $0xc] sm:$0xf]
        %v262 = vld [vmem:[#allocation7 + $0x1] sm:$0x1]
        %v263 = vperm.slane %v262, 0
        %v268 = vunpack.c.l.b16 %v258
        %v269 = vunpack.c.l.b16 %v259
        %v270 = vunpack.c.l.b16 %v260
        %v271 = vunpack.c.l.b16 %v261
        %v272 = vpack.c.b16 %v269, %v268
        %v273 = vpack.c.b16 %v271, %v270
        %276 = vmatpush.bf16.msra.mxu0 0
        %277 = vmatpush.bf16.msra.mxu0 0
        %278 = vmatpush.bf16.msra.mxu0 0
        %279 = vmatpush.bf16.msra.mxu0 0
        %280 = vmatpush.bf16.msra.mxu0 0
        %281 = vmatpush.bf16.msra.mxu0 0
        %282 = vmatpush.bf16.msra.mxu0 %v273
        %283 = vmatpush.bf16.msra.mxu0 %v272
        %284 = vmatmul.bf16.gmra.mxu0 %v242
        %v285 = vpop.f32.mrf.mxu0
        %v286 = vadd.f32 %v263, %v285
        %v287 = vpop.f32.mrf.mxu0
        %288 = vdwg.mxu0
        %s289 = scalar_lea.vmem [#allocation5], 32
        %v290 = vld [vmem:[%s289] sm:$0xf]
        %v291 = vld [vmem:[%s289 + $0x4] sm:$0xf]
        %v292 = vld [vmem:[%s289 + $0x8] sm:$0xf]
        %v293 = vld [vmem:[%s289 + $0xc] sm:$0xf]
        %v294 = vld [vmem:[#allocation7 + $0x2] sm:$0x1]
        %v295 = vperm.slane %v294, 0
        %v300 = vunpack.c.l.b16 %v290
        %v301 = vunpack.c.l.b16 %v291
        %v302 = vunpack.c.l.b16 %v292
        %v303 = vunpack.c.l.b16 %v293
        %v304 = vpack.c.b16 %v301, %v300
        %v305 = vpack.c.b16 %v303, %v302
        %308 = vmatpush.bf16.msra.mxu0 0
        %309 = vmatpush.bf16.msra.mxu0 0
        %310 = vmatpush.bf16.msra.mxu0 0
        %311 = vmatpush.bf16.msra.mxu0 0
        %312 = vmatpush.bf16.msra.mxu0 0
        %313 = vmatpush.bf16.msra.mxu0 0
        %314 = vmatpush.bf16.msra.mxu0 %v305
        %315 = vmatpush.bf16.msra.mxu0 %v304
        %316 = vmatmul.bf16.gmra.mxu0 %v242
        %v317 = vpop.f32.mrf.mxu0
        %v318 = vadd.f32 %v295, %v317
        %v319 = vpop.f32.mrf.mxu0
        %320 = vdwg.mxu0
        %322 = vrot.lane.b32.xlu0 %v254, 120
        %v323 = vpop.permute.xlu0 %322
        %325 = vrot.lane.b32.xlu0 %v254, 112
        %v326 = vpop.permute.xlu0 %325
        %328 = vrot.lane.b32.xlu0 %v254, 104
        %v329 = vpop.permute.xlu0 %328
        %v331 = vrot.slane %v326, 4
        %vm332 = vcmask 1047556
        %v333 = vsel %vm332, %v331, %v254
        %v334 = vrot.slane %v254, 4
        %v335 = vsel %vm332, %v326, %v334
        %v337 = vunpack.c.l.s4 1983009808
        %v338 = vunpack.c.0.s8 %v337
        %v339 = vperm.slane %v333, %v338
        %v341 = vunpack.c.l.s4 1983009808
        %v342 = vunpack.c.0.s8 %v341
        %v343 = vperm.slane %v335, %v342
        %v344 = vrot.slane %v329, 4
        %v345 = vsel %vm332, %v344, %v323
        %v346 = vrot.slane %v323, 4
        %v347 = vsel %vm332, %v329, %v346
        %v349 = vunpack.c.l.s4 1983009808
        %v350 = vunpack.c.0.s8 %v349
        %v351 = vperm.slane %v345, %v350
        %v353 = vunpack.c.l.s4 1983009808
        %v354 = vunpack.c.0.s8 %v353
        %v355 = vperm.slane %v347, %v354
        %v356 = vrot.slane %v351, 4
        %v357 = vsel %vm332, %v356, %v339
        %v358 = vrot.slane %v339, 4
        %v359 = vsel %vm332, %v351, %v358
        %v361 = vunpack.c.l.s4 1934713408
        %v362 = vunpack.c.0.s8 %v361
        %v363 = vperm.slane %v357, %v362
        %v365 = vunpack.c.l.s4 1934713408
        %v366 = vunpack.c.0.s8 %v365
        %v367 = vperm.slane %v359, %v366
        %v368 = vrot.slane %v355, 4
        %v369 = vsel %vm332, %v368, %v343
        %v370 = vrot.slane %v343, 4
        %v371 = vsel %vm332, %v355, %v370
        %v373 = vunpack.c.l.s4 1934713408
        %v374 = vunpack.c.0.s8 %v373
        %v375 = vperm.slane %v369, %v374
        %v377 = vunpack.c.l.s4 1934713408
        %v378 = vunpack.c.0.s8 %v377
        %v379 = vperm.slane %v371, %v378
        %v380 = vrot.slane %v363, 4
        %v381 = vsel %vm332, 0.0, %v380
        %v382 = vrot.slane %v367, 4
        %v383 = vsel %vm332, 0.0, %v382
        %v384 = vrot.slane %v375, 4
        %v385 = vsel %vm332, 0.0, %v384
        %v386 = vrot.slane %v379, 4
        %v387 = vsel %vm332, 0.0, %v386
        %v388 = vsel %vm332, %v382, %v363
        %v390 = vunpack.c.l.s4 1983009808
        %v391 = vunpack.c.0.s8 %v390
        %v392 = vperm.slane %v388, %v391
        %v393 = vrot.slane %v383, 4
        %v394 = vsel %vm332, %v393, %v381
        %v396 = vunpack.c.l.s4 1983009808
        %v397 = vunpack.c.0.s8 %v396
        %v398 = vperm.slane %v394, %v397
        %v399 = vsel %vm332, %v386, %v375
        %v401 = vunpack.c.l.s4 1983009808
        %v402 = vunpack.c.0.s8 %v401
        %v403 = vperm.slane %v399, %v402
        %v404 = vrot.slane %v387, 4
        %v405 = vsel %vm332, %v404, %v385
        %v407 = vunpack.c.l.s4 1983009808
        %v408 = vunpack.c.0.s8 %v407
        %v409 = vperm.slane %v405, %v408
        %v410 = vrot.slane %v398, 4
        %v411 = vsel %vm332, %v410, %v392
        %v412 = vrot.slane %v392, 4
        %v413 = vsel %vm332, %v398, %v412
        %v415 = vunpack.c.l.s4 1934713408
        %v416 = vunpack.c.0.s8 %v415
        %v417 = vperm.slane %v411, %v416
        %v419 = vunpack.c.l.s4 1934713408
        %v420 = vunpack.c.0.s8 %v419
        %v421 = vperm.slane %v413, %v420
        %v422 = vrot.slane %v409, 4
        %v423 = vsel %vm332, %v422, %v403
        %v424 = vrot.slane %v403, 4
        %v425 = vsel %vm332, %v409, %v424
        %v427 = vunpack.c.l.s4 1934713408
        %v428 = vunpack.c.0.s8 %v427
        %v429 = vperm.slane %v423, %v428
        %v431 = vunpack.c.l.s4 1934713408
        %v432 = vunpack.c.0.s8 %v431
        %v433 = vperm.slane %v425, %v432
        %v434 = vrot.slane %v429, 4
        %v435 = vsel %vm332, %v434, %v417
        %v436 = vrot.slane %v417, 4
        %v437 = vsel %vm332, %v429, %v436
        %v438 = vrot.slane %v433, 4
        %v439 = vsel %vm332, %v438, %v421
        %v440 = vrot.slane %v421, 4
        %v441 = vsel %vm332, %v433, %v440
        %v442 = vpack.c.bf16 %v435, %v435
        %v443 = vpack.c.bf16 %v437, %v437
        %v444 = vpack.c.bf16 %v439, %v439
        %v445 = vpack.c.bf16 %v441, %v441
        %447 = vrot.lane.b32.xlu0 %v286, 120
        %v448 = vpop.permute.xlu0 %447
        %450 = vrot.lane.b32.xlu0 %v286, 112
        %v451 = vpop.permute.xlu0 %450
        %453 = vrot.lane.b32.xlu0 %v286, 104
        %v454 = vpop.permute.xlu0 %453
        %v456 = vrot.slane %v451, 4
        %v457 = vsel %vm332, %v456, %v286
        %v458 = vrot.slane %v286, 4
        %v459 = vsel %vm332, %v451, %v458
        %v461 = vunpack.c.l.s4 1983009808
        %v462 = vunpack.c.0.s8 %v461
        %v463 = vperm.slane %v457, %v462
        %v465 = vunpack.c.l.s4 1983009808
        %v466 = vunpack.c.0.s8 %v465
        %v467 = vperm.slane %v459, %v466
        %v468 = vrot.slane %v454, 4
        %v469 = vsel %vm332, %v468, %v448
        %v470 = vrot.slane %v448, 4
        %v471 = vsel %vm332, %v454, %v470
        %v473 = vunpack.c.l.s4 1983009808
        %v474 = vunpack.c.0.s8 %v473
        %v475 = vperm.slane %v469, %v474
        %v477 = vunpack.c.l.s4 1983009808
        %v478 = vunpack.c.0.s8 %v477
        %v479 = vperm.slane %v471, %v478
        %v480 = vrot.slane %v475, 4
        %v481 = vsel %vm332, %v480, %v463
        %v482 = vrot.slane %v463, 4
        %v483 = vsel %vm332, %v475, %v482
        %v485 = vunpack.c.l.s4 1934713408
        %v486 = vunpack.c.0.s8 %v485
        %v487 = vperm.slane %v481, %v486
        %v489 = vunpack.c.l.s4 1934713408
        %v490 = vunpack.c.0.s8 %v489
        %v491 = vperm.slane %v483, %v490
        %v492 = vrot.slane %v479, 4
        %v493 = vsel %vm332, %v492, %v467
        %v494 = vrot.slane %v467, 4
        %v495 = vsel %vm332, %v479, %v494
        %v497 = vunpack.c.l.s4 1934713408
        %v498 = vunpack.c.0.s8 %v497
        %v499 = vperm.slane %v493, %v498
        %v501 = vunpack.c.l.s4 1934713408
        %v502 = vunpack.c.0.s8 %v501
        %v503 = vperm.slane %v495, %v502
        %v504 = vrot.slane %v487, 4
        %v505 = vsel %vm332, 0.0, %v504
        %v506 = vrot.slane %v491, 4
        %v507 = vsel %vm332, 0.0, %v506
        %v508 = vrot.slane %v499, 4
        %v509 = vsel %vm332, 0.0, %v508
        %v510 = vrot.slane %v503, 4
        %v511 = vsel %vm332, 0.0, %v510
        %v512 = vsel %vm332, %v506, %v487
        %v514 = vunpack.c.l.s4 1983009808
        %v515 = vunpack.c.0.s8 %v514
        %v516 = vperm.slane %v512, %v515
        %v517 = vrot.slane %v507, 4
        %v518 = vsel %vm332, %v517, %v505
        %v520 = vunpack.c.l.s4 1983009808
        %v521 = vunpack.c.0.s8 %v520
        %v522 = vperm.slane %v518, %v521
        %v523 = vsel %vm332, %v510, %v499
        %v525 = vunpack.c.l.s4 1983009808
        %v526 = vunpack.c.0.s8 %v525
        %v527 = vperm.slane %v523, %v526
        %v528 = vrot.slane %v511, 4
        %v529 = vsel %vm332, %v528, %v509
        %v531 = vunpack.c.l.s4 1983009808
        %v532 = vunpack.c.0.s8 %v531
        %v533 = vperm.slane %v529, %v532
        %v534 = vrot.slane %v522, 4
        %v535 = vsel %vm332, %v534, %v516
        %v536 = vrot.slane %v516, 4
        %v537 = vsel %vm332, %v522, %v536
        %v539 = vunpack.c.l.s4 1934713408
        %v540 = vunpack.c.0.s8 %v539
        %v541 = vperm.slane %v535, %v540
        %v543 = vunpack.c.l.s4 1934713408
        %v544 = vunpack.c.0.s8 %v543
        %v545 = vperm.slane %v537, %v544
        %v546 = vrot.slane %v533, 4
        %v547 = vsel %vm332, %v546, %v527
        %v548 = vrot.slane %v527, 4
        %v549 = vsel %vm332, %v533, %v548
        %v551 = vunpack.c.l.s4 1934713408
        %v552 = vunpack.c.0.s8 %v551
        %v553 = vperm.slane %v547, %v552
        %v555 = vunpack.c.l.s4 1934713408
        %v556 = vunpack.c.0.s8 %v555
        %v557 = vperm.slane %v549, %v556
        %v558 = vrot.slane %v553, 4
        %v559 = vsel %vm332, %v558, %v541
        %v560 = vrot.slane %v541, 4
        %v561 = vsel %vm332, %v553, %v560
        %v562 = vrot.slane %v557, 4
        %v563 = vsel %vm332, %v562, %v545
        %v564 = vrot.slane %v545, 4
        %v565 = vsel %vm332, %v557, %v564
        %v566 = vpack.c.bf16 %v559, %v559
        %v567 = vpack.c.bf16 %v561, %v561
        %v568 = vpack.c.bf16 %v563, %v563
        %v569 = vpack.c.bf16 %v565, %v565
        %571 = vrot.lane.b32.xlu0 %v318, 120
        %v572 = vpop.permute.xlu0 %571
        %574 = vrot.lane.b32.xlu0 %v318, 112
        %v575 = vpop.permute.xlu0 %574
        %577 = vrot.lane.b32.xlu0 %v318, 104
        %v578 = vpop.permute.xlu0 %577
        %v580 = vrot.slane %v575, 4
        %v581 = vsel %vm332, %v580, %v318
        %v582 = vrot.slane %v318, 4
        %v583 = vsel %vm332, %v575, %v582
        %v585 = vunpack.c.l.s4 1983009808
        %v586 = vunpack.c.0.s8 %v585
        %v587 = vperm.slane %v581, %v586
        %v589 = vunpack.c.l.s4 1983009808
        %v590 = vunpack.c.0.s8 %v589
        %v591 = vperm.slane %v583, %v590
        %v592 = vrot.slane %v578, 4
        %v593 = vsel %vm332, %v592, %v572
        %v594 = vrot.slane %v572, 4
        %v595 = vsel %vm332, %v578, %v594
        %v597 = vunpack.c.l.s4 1983009808
        %v598 = vunpack.c.0.s8 %v597
        %v599 = vperm.slane %v593, %v598
        %v601 = vunpack.c.l.s4 1983009808
        %v602 = vunpack.c.0.s8 %v601
        %v603 = vperm.slane %v595, %v602
        %v604 = vrot.slane %v599, 4
        %v605 = vsel %vm332, %v604, %v587
        %v606 = vrot.slane %v587, 4
        %v607 = vsel %vm332, %v599, %v606
        %v609 = vunpack.c.l.s4 1934713408
        %v610 = vunpack.c.0.s8 %v609
        %v611 = vperm.slane %v605, %v610
        %v613 = vunpack.c.l.s4 1934713408
        %v614 = vunpack.c.0.s8 %v613
        %v615 = vperm.slane %v607, %v614
        %v616 = vrot.slane %v603, 4
        %v617 = vsel %vm332, %v616, %v591
        %v618 = vrot.slane %v591, 4
        %v619 = vsel %vm332, %v603, %v618
        %v621 = vunpack.c.l.s4 1934713408
        %v622 = vunpack.c.0.s8 %v621
        %v623 = vperm.slane %v617, %v622
        %v625 = vunpack.c.l.s4 1934713408
        %v626 = vunpack.c.0.s8 %v625
        %v627 = vperm.slane %v619, %v626
        %v628 = vrot.slane %v611, 4
        %v629 = vsel %vm332, 0.0, %v628
        %v630 = vrot.slane %v615, 4
        %v631 = vsel %vm332, 0.0, %v630
        %v632 = vrot.slane %v623, 4
        %v633 = vsel %vm332, 0.0, %v632
        %v634 = vrot.slane %v627, 4
        %v635 = vsel %vm332, 0.0, %v634
        %v636 = vsel %vm332, %v630, %v611
        %v638 = vunpack.c.l.s4 1983009808
        %v639 = vunpack.c.0.s8 %v638
        %v640 = vperm.slane %v636, %v639
        %v641 = vrot.slane %v631, 4
        %v642 = vsel %vm332, %v641, %v629
        %v644 = vunpack.c.l.s4 1983009808
        %v645 = vunpack.c.0.s8 %v644
        %v646 = vperm.slane %v642, %v645
        %v647 = vsel %vm332, %v634, %v623
        %v649 = vunpack.c.l.s4 1983009808
        %v650 = vunpack.c.0.s8 %v649
        %v651 = vperm.slane %v647, %v650
        %v652 = vrot.slane %v635, 4
        %v653 = vsel %vm332, %v652, %v633
        %v655 = vunpack.c.l.s4 1983009808
        %v656 = vunpack.c.0.s8 %v655
        %v657 = vperm.slane %v653, %v656
        %v658 = vrot.slane %v646, 4
        %v659 = vsel %vm332, %v658, %v640
        %v660 = vrot.slane %v640, 4
        %v661 = vsel %vm332, %v646, %v660
        %v663 = vunpack.c.l.s4 1934713408
        %v664 = vunpack.c.0.s8 %v663
        %v665 = vperm.slane %v659, %v664
        %v667 = vunpack.c.l.s4 1934713408
        %v668 = vunpack.c.0.s8 %v667
        %v669 = vperm.slane %v661, %v668
        %v670 = vrot.slane %v657, 4
        %v671 = vsel %vm332, %v670, %v651
        %v672 = vrot.slane %v651, 4
        %v673 = vsel %vm332, %v657, %v672
        %v675 = vunpack.c.l.s4 1934713408
        %v676 = vunpack.c.0.s8 %v675
        %v677 = vperm.slane %v671, %v676
        %v679 = vunpack.c.l.s4 1934713408
        %v680 = vunpack.c.0.s8 %v679
        %v681 = vperm.slane %v673, %v680
        %v682 = vrot.slane %v677, 4
        %v683 = vsel %vm332, %v682, %v665
        %v684 = vrot.slane %v665, 4
        %v685 = vsel %vm332, %v677, %v684
        %v686 = vrot.slane %v681, 4
        %v687 = vsel %vm332, %v686, %v669
        %v688 = vrot.slane %v669, 4
        %v689 = vsel %vm332, %v681, %v688
        %v690 = vpack.c.bf16 %v683, %v683
        %v691 = vpack.c.bf16 %v685, %v685
        %v692 = vpack.c.bf16 %v687, %v687
        %v693 = vpack.c.bf16 %v689, %v689
        %vm694 = vcmask 64512
        %v696 = vsel %vm694, %v442, 0
        %v699 = vsel %vm694, %v566, 0
        %701 = vmatpush.bf16.xpose.msra.mxu0 0
        %702 = vmatpush.bf16.xpose.msra.mxu0 0
        %703 = vmatpush.bf16.xpose.msra.mxu0 0
        %704 = vmatpush.bf16.xpose.msra.mxu0 0
        %705 = vmatpush.bf16.xpose.msra.mxu0 0
        %706 = vmatpush.bf16.xpose.msra.mxu0 0
        %707 = vmatpush.bf16.xpose.msra.mxu0 0
        %708 = vmatpush.bf16.xpose.msra.mxu0 %v699
        %709 = vmatmul.bf16.gmra.mxu0 %v696
        %v710 = vpop.f32.mrf.mxu0
        %v711 = vadd.f32 0.0, %v710
        %v712 = vpop.f32.mrf.mxu0
        %713 = vdwg.mxu0
        %v715 = vsel %vm694, %v443, 0
        %v718 = vsel %vm694, %v567, 0
        %720 = vmatpush.bf16.xpose.msra.mxu0 0
        %721 = vmatpush.bf16.xpose.msra.mxu0 0
        %722 = vmatpush.bf16.xpose.msra.mxu0 0
        %723 = vmatpush.bf16.xpose.msra.mxu0 0
        %724 = vmatpush.bf16.xpose.msra.mxu0 0
        %725 = vmatpush.bf16.xpose.msra.mxu0 0
        %726 = vmatpush.bf16.xpose.msra.mxu0 0
        %727 = vmatpush.bf16.xpose.msra.mxu0 %v718
        %728 = vmatmul.bf16.gmra.mxu0 %v715
        %v729 = vpop.f32.mrf.mxu0
        %v730 = vadd.f32 0.0, %v729
        %v731 = vpop.f32.mrf.mxu0
        %732 = vdwg.mxu0
        %v734 = vsel %vm694, %v444, 0
        %v737 = vsel %vm694, %v568, 0
        %739 = vmatpush.bf16.xpose.msra.mxu0 0
        %740 = vmatpush.bf16.xpose.msra.mxu0 0
        %741 = vmatpush.bf16.xpose.msra.mxu0 0
        %742 = vmatpush.bf16.xpose.msra.mxu0 0
        %743 = vmatpush.bf16.xpose.msra.mxu0 0
        %744 = vmatpush.bf16.xpose.msra.mxu0 0
        %745 = vmatpush.bf16.xpose.msra.mxu0 0
        %746 = vmatpush.bf16.xpose.msra.mxu0 %v737
        %747 = vmatmul.bf16.gmra.mxu0 %v734
        %v748 = vpop.f32.mrf.mxu0
        %v749 = vadd.f32 0.0, %v748
        %v750 = vpop.f32.mrf.mxu0
        %751 = vdwg.mxu0
        %v753 = vsel %vm694, %v445, 0
        %v756 = vsel %vm694, %v569, 0
        %758 = vmatpush.bf16.xpose.msra.mxu0 0
        %759 = vmatpush.bf16.xpose.msra.mxu0 0
        %760 = vmatpush.bf16.xpose.msra.mxu0 0
        %761 = vmatpush.bf16.xpose.msra.mxu0 0
        %762 = vmatpush.bf16.xpose.msra.mxu0 0
        %763 = vmatpush.bf16.xpose.msra.mxu0 0
        %764 = vmatpush.bf16.xpose.msra.mxu0 0
        %765 = vmatpush.bf16.xpose.msra.mxu0 %v756
        %766 = vmatmul.bf16.gmra.mxu0 %v753
        %v767 = vpop.f32.mrf.mxu0
        %v768 = vadd.f32 0.0, %v767
        %v769 = vpop.f32.mrf.mxu0
        %770 = vdwg.mxu0
        %v771 = vsel %vm694, %v711, -inf
        %772 = vmax.xlane.f32.xlu0 %v771
        %v773 = vpop.xlane.xlu0 %772
        %v774 = vsel %vm694, %v730, -inf
        %775 = vmax.xlane.f32.xlu0 %v774
        %v776 = vpop.xlane.xlu0 %775
        %v777 = vsel %vm694, %v749, -inf
        %778 = vmax.xlane.f32.xlu0 %v777
        %v779 = vpop.xlane.xlu0 %778
        %v780 = vsel %vm694, %v768, -inf
        %781 = vmax.xlane.f32.xlu0 %v780
        %v782 = vpop.xlane.xlu0 %781
        %v783 = vsub.f32 %v711, %v773
        %v784 = vsub.f32 %v730, %v776
        %v785 = vsub.f32 %v749, %v779
        %v786 = vsub.f32 %v768, %v782
        %v787 = vmul.f32 %v783, 1.442695
        %v788 = vpow.pop %v787
        %v789 = vmul.f32 %v784, 1.442695
        %v790 = vpow.pop %v789
        %v791 = vmul.f32 %v785, 1.442695
        %v792 = vpow.pop %v791
        %v793 = vmul.f32 %v786, 1.442695
        %v794 = vpow.pop %v793
        %v795 = vsel %vm694, %v788, 0.0
        %796 = vadd.xlane.f32.xlu0 %v795
        %v797 = vpop.xlane.xlu0 %796
        %v798 = vsel %vm694, %v790, 0.0
        %799 = vadd.xlane.f32.xlu0 %v798
        %v800 = vpop.xlane.xlu0 %799
        %v801 = vsel %vm694, %v792, 0.0
        %802 = vadd.xlane.f32.xlu0 %v801
        %v803 = vpop.xlane.xlu0 %802
        %v804 = vsel %vm694, %v794, 0.0
        %805 = vadd.xlane.f32.xlu0 %v804
        %v806 = vpop.xlane.xlu0 %805
        %v807 = vrcp.pop %v797
        %v808 = vrcp.pop %v800
        %v809 = vrcp.pop %v803
        %v810 = vrcp.pop %v806
        %v811 = vmul.f32 %v788, %v807
        %v812 = vmul.f32 %v790, %v808
        %v813 = vmul.f32 %v792, %v809
        %v814 = vmul.f32 %v794, %v810
        %v815 = vpack.c.bf16 %v811, %v811
        %v816 = vpack.c.bf16 %v812, %v812
        %v817 = vpack.c.bf16 %v813, %v813
        %v818 = vpack.c.bf16 %v814, %v814
        %v820 = vsel %vm694, %v815, 0
        %vm822 = vcmask 1043456
        %v824 = vsel %vm822, %v690, 0
        %826 = vmatpush.bf16.msra.mxu0 0
        %827 = vmatpush.bf16.msra.mxu0 0
        %828 = vmatpush.bf16.msra.mxu0 0
        %829 = vmatpush.bf16.msra.mxu0 0
        %830 = vmatpush.bf16.msra.mxu0 0
        %831 = vmatpush.bf16.msra.mxu0 0
        %832 = vmatpush.bf16.msra.mxu0 0
        %833 = vmatpush.bf16.msra.mxu0 %v824
        %834 = vmatmul.bf16.gmra.mxu0 %v820
        %v835 = vpop.f32.mrf.mxu0
        %v836 = vadd.f32 0.0, %v835
        %v837 = vpop.f32.mrf.mxu0
        %838 = vdwg.mxu0
        %v840 = vsel %vm694, %v816, 0
        %v843 = vsel %vm822, %v691, 0
        %845 = vmatpush.bf16.msra.mxu0 0
        %846 = vmatpush.bf16.msra.mxu0 0
        %847 = vmatpush.bf16.msra.mxu0 0
        %848 = vmatpush.bf16.msra.mxu0 0
        %849 = vmatpush.bf16.msra.mxu0 0
        %850 = vmatpush.bf16.msra.mxu0 0
        %851 = vmatpush.bf16.msra.mxu0 0
        %852 = vmatpush.bf16.msra.mxu0 %v843
        %853 = vmatmul.bf16.gmra.mxu0 %v840
        %v854 = vpop.f32.mrf.mxu0
        %v855 = vadd.f32 0.0, %v854
        %v856 = vpop.f32.mrf.mxu0
        %857 = vdwg.mxu0
        %v859 = vsel %vm694, %v817, 0
        %v862 = vsel %vm822, %v692, 0
        %864 = vmatpush.bf16.msra.mxu0 0
        %865 = vmatpush.bf16.msra.mxu0 0
        %866 = vmatpush.bf16.msra.mxu0 0
        %867 = vmatpush.bf16.msra.mxu0 0
        %868 = vmatpush.bf16.msra.mxu0 0
        %869 = vmatpush.bf16.msra.mxu0 0
        %870 = vmatpush.bf16.msra.mxu0 0
        %871 = vmatpush.bf16.msra.mxu0 %v862
        %872 = vmatmul.bf16.gmra.mxu0 %v859
        %v873 = vpop.f32.mrf.mxu0
        %v874 = vadd.f32 0.0, %v873
        %v875 = vpop.f32.mrf.mxu0
        %876 = vdwg.mxu0
        %v878 = vsel %vm694, %v818, 0
        %v881 = vsel %vm822, %v693, 0
        %883 = vmatpush.bf16.msra.mxu0 0
        %884 = vmatpush.bf16.msra.mxu0 0
        %885 = vmatpush.bf16.msra.mxu0 0
        %886 = vmatpush.bf16.msra.mxu0 0
        %887 = vmatpush.bf16.msra.mxu0 0
        %888 = vmatpush.bf16.msra.mxu0 0
        %889 = vmatpush.bf16.msra.mxu0 0
        %890 = vmatpush.bf16.msra.mxu0 %v881
        %891 = vmatmul.bf16.gmra.mxu0 %v878
        %v892 = vpop.f32.mrf.mxu0
        %v893 = vadd.f32 0.0, %v892
        %v894 = vpop.f32.mrf.mxu0
        %895 = vdwg.mxu0
        %v896 = vrot.slane %v874, 4
        %v897 = vsel %vm332, %v896, %v836
        %v898 = vrot.slane %v836, 4
        %v899 = vsel %vm332, %v874, %v898
        %v901 = vunpack.c.l.s4 1983009808
        %v902 = vunpack.c.0.s8 %v901
        %v903 = vperm.slane %v897, %v902
        %v905 = vunpack.c.l.s4 1983009808
        %v906 = vunpack.c.0.s8 %v905
        %v907 = vperm.slane %v899, %v906
        %v908 = vrot.slane %v893, 4
        %v909 = vsel %vm332, %v908, %v855
        %v910 = vrot.slane %v855, 4
        %v911 = vsel %vm332, %v893, %v910
        %v913 = vunpack.c.l.s4 1983009808
        %v914 = vunpack.c.0.s8 %v913
        %v915 = vperm.slane %v909, %v914
        %v917 = vunpack.c.l.s4 1983009808
        %v918 = vunpack.c.0.s8 %v917
        %v919 = vperm.slane %v911, %v918
        %v920 = vrot.slane %v915, 4
        %v921 = vsel %vm332, %v920, %v903
        %v922 = vrot.slane %v903, 4
        %v923 = vsel %vm332, %v915, %v922
        %v925 = vunpack.c.l.s4 1934713408
        %v926 = vunpack.c.0.s8 %v925
        %v927 = vperm.slane %v921, %v926
        %v929 = vunpack.c.l.s4 1934713408
        %v930 = vunpack.c.0.s8 %v929
        %v931 = vperm.slane %v923, %v930
        %v932 = vrot.slane %v919, 4
        %v933 = vsel %vm332, %v932, %v907
        %v934 = vrot.slane %v907, 4
        %v935 = vsel %vm332, %v919, %v934
        %v937 = vunpack.c.l.s4 1934713408
        %v938 = vunpack.c.0.s8 %v937
        %v939 = vperm.slane %v933, %v938
        %v941 = vunpack.c.l.s4 1934713408
        %v942 = vunpack.c.0.s8 %v941
        %v943 = vperm.slane %v935, %v942
        %v944 = vrot.slane %v927, 4
        %v945 = vsel %vm332, 0.0, %v944
        %v946 = vrot.slane %v931, 4
        %v947 = vsel %vm332, 0.0, %v946
        %v948 = vrot.slane %v939, 4
        %v949 = vsel %vm332, 0.0, %v948
        %v950 = vrot.slane %v943, 4
        %v951 = vsel %vm332, 0.0, %v950
        %v952 = vsel %vm332, %v946, %v927
        %v954 = vunpack.c.l.s4 1983009808
        %v955 = vunpack.c.0.s8 %v954
        %v956 = vperm.slane %v952, %v955
        %v957 = vrot.slane %v947, 4
        %v958 = vsel %vm332, %v957, %v945
        %v960 = vunpack.c.l.s4 1983009808
        %v961 = vunpack.c.0.s8 %v960
        %v962 = vperm.slane %v958, %v961
        %v963 = vsel %vm332, %v950, %v939
        %v965 = vunpack.c.l.s4 1983009808
        %v966 = vunpack.c.0.s8 %v965
        %v967 = vperm.slane %v963, %v966
        %v968 = vrot.slane %v951, 4
        %v969 = vsel %vm332, %v968, %v949
        %v971 = vunpack.c.l.s4 1983009808
        %v972 = vunpack.c.0.s8 %v971
        %v973 = vperm.slane %v969, %v972
        %v974 = vrot.slane %v962, 4
        %v975 = vsel %vm332, %v974, %v956
        %v976 = vrot.slane %v956, 4
        %v977 = vsel %vm332, %v962, %v976
        %v979 = vunpack.c.l.s4 1934713408
        %v980 = vunpack.c.0.s8 %v979
        %v981 = vperm.slane %v975, %v980
        %v983 = vunpack.c.l.s4 1934713408
        %v984 = vunpack.c.0.s8 %v983
        %v985 = vperm.slane %v977, %v984
        %v986 = vrot.slane %v973, 4
        %v987 = vsel %vm332, %v986, %v967
        %v988 = vrot.slane %v967, 4
        %v989 = vsel %vm332, %v973, %v988
        %v991 = vunpack.c.l.s4 1934713408
        %v992 = vunpack.c.0.s8 %v991
        %v993 = vperm.slane %v987, %v992
        %v995 = vunpack.c.l.s4 1934713408
        %v996 = vunpack.c.0.s8 %v995
        %v997 = vperm.slane %v989, %v996
        %v998 = vrot.slane %v993, 4
        %v999 = vsel %vm332, %v998, %v981
        %v1000 = vrot.slane %v981, 4
        %v1001 = vsel %vm332, %v993, %v1000
        %v1002 = vrot.slane %v997, 4
        %v1003 = vsel %vm332, %v1002, %v985
        %v1004 = vrot.slane %v985, 4
        %v1005 = vsel %vm332, %v997, %v1004
        %1007 = vrot.lane.b32.xlu0 %v1001, 8
        %v1008 = vpop.permute.xlu0 %1007
        %1011 = vrot.lane.b32.xlu0 %v1003, 16
        %v1012 = vpop.permute.xlu0 %1011
        %1015 = vrot.lane.b32.xlu0 %v1005, 24
        %v1016 = vpop.permute.xlu0 %1015
        %v1018 = vsel %vm694, %v999, %v1008
        %vm1019 = vcmask 130048
        %v1020 = vsel %vm1019, %v1018, %v1012
        %vm1021 = vcmask 195584
        %v1022 = vsel %vm1021, %v1020, %v1016
        %v1023 = vpack.c.bf16 %v1022, %v1022
        %s1024 = scalar_lea.vmem [#allocation5], 48
        %v1025 = vld [vmem:[%s1024] sm:$0xf]
        %v1026 = vld [vmem:[%s1024 + $0x4] sm:$0xf]
        %v1027 = vld [vmem:[%s1024 + $0x8] sm:$0xf]
        %v1028 = vld [vmem:[%s1024 + $0xc] sm:$0xf]
        %v1029 = vld [vmem:[#allocation7 + $0x3] sm:$0x1]
        %v1030 = vperm.slane %v1029, 0
        %v1035 = vunpack.c.l.b16 %v1025
        %v1036 = vunpack.c.l.b16 %v1026
        %v1037 = vunpack.c.l.b16 %v1027
        %v1038 = vunpack.c.l.b16 %v1028
        %v1039 = vpack.c.b16 %v1036, %v1035
        %v1040 = vpack.c.b16 %v1038, %v1037
        %v1044 = vsel %vm240, %v1023, 0
        %1046 = vmatpush.bf16.msra.mxu0 0
        %1047 = vmatpush.bf16.msra.mxu0 0
        %1048 = vmatpush.bf16.msra.mxu0 0
        %1049 = vmatpush.bf16.msra.mxu0 0
        %1050 = vmatpush.bf16.msra.mxu0 0
        %1051 = vmatpush.bf16.msra.mxu0 0
        %1052 = vmatpush.bf16.msra.mxu0 %v1040
        %1053 = vmatpush.bf16.msra.mxu0 %v1039
        %1054 = vmatmul.bf16.gmra.mxu0 %v1044
        %v1055 = vpop.f32.mrf.mxu0
        %v1056 = vadd.f32 %v1030, %v1055
        %v1057 = vpop.f32.mrf.mxu0
        %1058 = vdwg.mxu0
        %v1059 = vadd.f32 %v1056, %v220
        %v1060 = vpack.c.bf16 %v1059, %v1059
        %s1061 = scalar_lea.vmem [#allocation5], 64
        %v1062 = vld [vmem:[%s1061] sm:$0xf]
        %v1063 = vld [vmem:[%s1061 + $0x4] sm:$0xf]
        %v1064 = vld [vmem:[%s1061 + $0x8] sm:$0xf]
        %v1065 = vld [vmem:[%s1061 + $0xc] sm:$0xf]
        %v1070 = vunpack.c.l.b16 %v1062
        %v1071 = vunpack.c.l.b16 %v1063
        %v1072 = vunpack.c.l.b16 %v1064
        %v1073 = vunpack.c.l.b16 %v1065
        %v1074 = vpack.c.b16 %v1071, %v1070
        %v1075 = vpack.c.b16 %v1073, %v1072
        %v1079 = vsel %vm240, %v1060, 0
        %1081 = vmatpush.bf16.msra.mxu0 0
        %1082 = vmatpush.bf16.msra.mxu0 0
        %1083 = vmatpush.bf16.msra.mxu0 0
        %1084 = vmatpush.bf16.msra.mxu0 0
        %1085 = vmatpush.bf16.msra.mxu0 0
        %1086 = vmatpush.bf16.msra.mxu0 0
        %1087 = vmatpush.bf16.msra.mxu0 %v1075
        %1088 = vmatpush.bf16.msra.mxu0 %v1074
        %1089 = vmatmul.bf16.gmra.mxu0 %v1079
        %v1090 = vpop.f32.mrf.mxu0
        %v1091 = vadd.f32 %v1059, %v1090
        %v1092 = vpop.f32.mrf.mxu0
        %1093 = vdwg.mxu0
        %1094 = vst.msk [vmem:[%s218] sm:$0xff] %vm240, %v1091
        %s1095 = sand.u32 %s97, 1
        %s1096 = scalar_lea.sflag [#allocation4], %s1095
        %s1097 = sand.u32 %s97, 1
        %s1098 = smul.addr %s1097, 8
        %s1099 = scalar_lea.vmem [#allocation8], %s1098
        // Predicated region
        $region45: #{tpu_custom_call.1} parent=31 // pred_check
          %p1100 = pneg %p107
        $region46: #{tpu_custom_call.1} parent=31 // pred_check_branch
          %1102 = sbr.rel (%p1100) target = $region48
        $region47: #{tpu_custom_call.1} parent=31 // pred_region
          %1104 = vsyncadd %s1096, 0
          %s1105 = smul.addr %s21, 8
          %s1106 = scalar_lea.hbm %s3, %s1105
          %s1108 = sshll.u32 %s1099, 4
          %s1109 = int_to_ptr.vmem [resolvable:$true] %s1108
          %s1110 = sshll.u32 %s1106, 4
          %s1111 = int_to_ptr.hbm [resolvable:$true] %s1110
          %1113 = dma.vmem_to_hbm [thread:$0]  %s1109, 128, %s1111, %s1096
        $region48: #{tpu_custom_call.1} parent=31 // pred_fallthru
          _
      $region32: #{tpu_custom_call.1} parent=5 // pred_fallthru
        _
      %p1114 = scmp.le.s32.totalorder 2, %s16
      // Predicated region
      $region49: #{tpu_custom_call.1} parent=5 // pred_check
        %p1115 = pneg %p1114
      $region50: #{tpu_custom_call.1} parent=5 // pred_check_branch
        %1117 = sbr.rel (%p1115) target = $region52
      $region51: #{tpu_custom_call.1} parent=5 // pred_region
        %s1118 = ssub.s32 %s16, 2
        // Predicated region
        $region53: #{tpu_custom_call.1} parent=51 // pred_check
          %p1119 = pneg %p113
        $region54: #{tpu_custom_call.1} parent=51 // pred_check_branch
          %1121 = sbr.rel (%p1119) target = $region56
        $region55: #{tpu_custom_call.1} parent=51 // pred_region
          %s1122 = sand.u32 %s98, 1
          %s1123 = scalar_lea.sflag [#allocation4], %s1122
          %s1124 = sand.u32 %s98, 1
          %s1125 = smul.addr %s1124, 8
          %s1126 = scalar_lea.vmem [#allocation8], %s1125
          %1128 = dma.done %s1123, 128
        $region56: #{tpu_custom_call.1} parent=51 // pred_fallthru
          _
      $region52: #{tpu_custom_call.1} parent=5 // pred_fallthru
        _
    $region6: #{tpu_custom_call.1} parent=1 // loop_footer
      %s20 = sadd.s32 1, %s16
    $region7: #{tpu_custom_call.1} parent=1 // loop_footer_branch
      %15 = sbr.rel target = $region3
    $region8: #{tpu_custom_call.1} parent=1 // loop_exit
      _
    %1129 = vsyncpa [#allocation3], 1
    %s1130 = scalar_lea.sflag [#allocation3], 1
    %1131 = vsyncpa %s1130, 1
    %1132 = vsyncpa [#allocation6], 1
    %1133 = vsyncpa [#allocation4], 1
    %s1134 = scalar_lea.sflag [#allocation4], 1
    %1135 = vsyncpa %s1134, 1

</llo_original>
